<compile_context>
chip_gen: v5e
topology: v5e:2x2
jax: 0.10.0
libtpu: 0.0.40
codegen_flags: <defaults>
</compile_context>

<pallas_src>
import jax
import jax.numpy as jnp
import numpy as np
from jax.experimental import pallas as pl
from jax.experimental.pallas import tpu as pltpu


OMEGA_SP = 1.0
OMEGA_LP = 0.5

_RESIDENT_BUDGET = 24 << 20   # working-set bound (bytes) for the single-pass fast path
_VMEM_FLOOR = 32 << 20
_VMEM_CAP = 48 << 20          # stay below v7x's 64 MiB physical VMEM


# ----------------------------- host-side parameter setup -----------------------------

def circle_filter(H, W, r, alpha):
    """Numpy port of CircleFilter (torch.meshgrid default indexing='ij')."""
    x_center = W // 2
    y_center = H // 2
    X, Y = np.meshgrid(np.arange(H), np.arange(W), indexing="ij")
    circle = np.sqrt(((X - x_center) ** 2 + (Y - y_center) ** 2).astype(np.float64))
    out = alpha * (circle < r).astype(np.float32)
    out[(~(circle < r)) & (~(circle > r))] = 0.5
    return out.astype(np.float32)


def build_lowpass_operator(H, W, r=2, alpha=1.0, lane_pad=128, rel_tol=1e-4):
    """Fold the (fftshift -> mask -> ifftshift) pipeline into one linear operator.

    Returns float32 arrays:
      * (wop,)  -- dense (hw, hw) operator, single matmul, when hw <= 2*kp (at hw=256
        the dense matmul costs the same MACs as the two skinny ones and avoids an extra
        MXU pass + coef cast), or
      * (U, V)  -- rank-kp factors with  x_flat @ U @ V == lowpass(x)_flat  when the
        low-rank form is strictly cheaper (hw >> kp, e.g. 64x64 images).
    Wrappers cast to bf16 where the streaming path wants it.
    """
    hw = H * W
    mask = circle_filter(H, W, r, alpha).astype(np.float64)
    basis = np.eye(hw, dtype=np.float64).reshape(hw, H, W)
    freq = np.fft.fftshift(np.fft.fft2(basis, axes=(1, 2), norm="ortho"), axes=(1, 2))
    low = np.fft.ifft2(np.fft.ifftshift(freq * mask, axes=(1, 2)),
                       axes=(1, 2), norm="ortho").real
    wop = np.ascontiguousarray(low.reshape(hw, hw))      # x_flat @ wop == lowpass(x)_flat

    u_svd, s, vt = np.linalg.svd(wop)
    k = max(int(np.sum(s > rel_tol * s[0])), 1)          # rank (13 for r=2)
    kp = min(max(-(-k // lane_pad) * lane_pad, lane_pad), hw)
    if hw <= 2 * kp:
        return (jnp.asarray(wop.astype(np.float32)),)
    U = np.zeros((hw, kp), np.float32)
    V = np.zeros((kp, hw), np.float32)
    U[:, :k] = (u_svd[:, :k] * s[:k]).astype(np.float32)
    V[:k, :] = vt[:k, :].astype(np.float32)
    return (jnp.asarray(U), jnp.asarray(V))


# ----------------------------- shared in-kernel helpers -----------------------------

def _compute_low(gt_mat, op_refs, use_lowrank):
    """Low-pass of a (rows, hw) tile via the precomputed linear operator (MXU)."""
    if use_lowrank:
        u_ref, v_ref = op_refs
        coef = jnp.dot(gt_mat, u_ref[...], preferred_element_type=jnp.float32)
        return jnp.dot(coef.astype(u_ref.dtype), v_ref[...],
                       preferred_element_type=jnp.float32)
    (w_ref,) = op_refs
    return jnp.dot(gt_mat, w_ref[...], preferred_element_type=jnp.float32)


def _fold_rows(x, op):
    """(tr, hw) -> (8, hw) elementwise fold over vreg-aligned row blocks (pure VPU)."""
    part = x[0:8, :]
    for i in range(1, x.shape[0] // 8):
        part = op(part, x[i * 8:(i + 1) * 8, :])
    return part


def _collapse(a, op):
    """(r, hw) -> (1, 1) full reduction (cross-lane XLU pass; used once per kernel)."""
    return op(op(a, axis=1, keepdims=True), axis=0, keepdims=True)


# ----------------------------- resident single-pass fast path -----------------------------

def _fal_loss_resident(gt_flat, pred_flat, ops, use_lowrank, inv_total):
    rows, hw = gt_flat.shape

    def kernel(*refs):
        gt_ref, pred_ref = refs[0], refs[1]
        op_refs = refs[2:-1]
        out_ref = refs[-1]

        gt_m = gt_ref[...]                                    # (rows, hw) f32
        low = _compute_low(gt_m, op_refs, use_lowrank)        # (rows, hw) f32
        y_sp = jnp.abs(gt_m - low)                            # |high freq|
        y_lp = jnp.abs(low)                                   # |low freq|

        sp_min = _collapse(y_sp, jnp.min)
        sp_max = _collapse(y_sp, jnp.max)
        lp_min = _collapse(y_lp, jnp.min)
        lp_max = _collapse(y_lp, jnp.max)
        inv_sp = OMEGA_SP / (sp_max - sp_min)                 # exact, one-time
        inv_lp = OMEGA_LP / (lp_max - lp_min)
        # fused weights: w_sp * w_lp = exp(norm_sp*omega_sp + norm_lp*omega_lp)
        expo = (y_sp - sp_min) * inv_sp + (y_lp - lp_min) * inv_lp
        contrib = jnp.exp(expo) * jnp.abs(gt_m - pred_ref[...])
        out_ref[...] = _collapse(contrib, jnp.sum) * inv_total

    op_bytes = sum(int(np.prod(o.shape)) * o.dtype.itemsize for o in ops)
    est = 8 * rows * hw * 4 + 2 * op_bytes + (1 << 20)
    vmem = min(max(est, _VMEM_FLOOR), _VMEM_CAP)

    out = pl.pallas_call(
        kernel,
        out_shape=jax.ShapeDtypeStruct((1, 1), jnp.float32),
        compiler_params=pltpu.CompilerParams(vmem_limit_bytes=vmem),
    )(gt_flat, pred_flat, *ops)
    return out[0, 0]


# ----------------------------- tiled two-pass streaming path -----------------------------

def _fal_loss_tiled(gt_flat, pred_flat, ops, use_lowrank, inv_total, tr):
    rows, hw = gt_flat.shape
    n_tiles = rows // tr
    n_ops = len(ops)

    # bf16 streaming halves HBM traffic (gt is streamed in both passes); the weighted-L1
    # accumulation below stays in f32.
    gt_bf = gt_flat.astype(jnp.bfloat16)
    pred_bf = pred_flat.astype(jnp.bfloat16)
    ops_bf = tuple(o.astype(jnp.bfloat16) for o in ops)

    def kernel(*refs):
        gt_ref, pred_ref = refs[0], refs[1]
        op_refs = refs[2:2 + n_ops]
        out_ref = refs[2 + n_ops]
        (sp_min, sp_max, lp_min, lp_max, acc,
         inv_sp_s, inv_lp_s, off_s) = refs[3 + n_ops:]

        p = pl.program_id(0)       # 0: global min/max stats, 1: weighted-L1 sum
        t = pl.program_id(1)       # row tile

        @pl.when((p == 0) & (t == 0))
        def _init():
            sp_min[...] = jnp.full(sp_min.shape, jnp.inf, jnp.float32)
            sp_max[...] = jnp.full(sp_max.shape, -jnp.inf, jnp.float32)
            lp_min[...] = jnp.full(lp_min.shape, jnp.inf, jnp.float32)
            lp_max[...] = jnp.full(lp_max.shape, -jnp.inf, jnp.float32)
            acc[...] = jnp.zeros(acc.shape, jnp.float32)

        gt_b = gt_ref[...]                                    # (tr, hw) bf16
        # TODO(synk): on v6e (128 MiB VMEM) `low` could be cached in scratch during
        #             pass 0 and reused in pass 1 to halve the MXU work.
        low = _compute_low(gt_b, op_refs, use_lowrank)        # (tr, hw) f32
        gt_f = gt_b.astype(jnp.float32)
        y_sp = jnp.abs(gt_f - low)
        y_lp = jnp.abs(low)

        @pl.when(p == 0)
        def _stats():
            # lane-wide accumulators: pure elementwise VPU updates per tile; the
            # expensive cross-lane collapse happens exactly once, in _derive/_final.
            sp_min[...] = jnp.minimum(sp_min[...], _fold_rows(y_sp, jnp.minimum))
            sp_max[...] = jnp.maximum(sp_max[...], _fold_rows(y_sp, jnp.maximum))
            lp_min[...] = jnp.minimum(lp_min[...], _fold_rows(y_lp, jnp.minimum))
            lp_max[...] = jnp.maximum(lp_max[...], _fold_rows(y_lp, jnp.maximum))

        @pl.when((p == 1) & (t == 0))
        def _derive():
            # one-time collapse of the stats + exact scale/offset for the fused weight
            spmin = _collapse(sp_min[...], jnp.min)
            spmax = _collapse(sp_max[...], jnp.max)
            lpmin = _collapse(lp_min[...], jnp.min)
            lpmax = _collapse(lp_max[...], jnp.max)
            isp = OMEGA_SP / (spmax - spmin)
            ilp = OMEGA_LP / (lpmax - lpmin)
            inv_sp_s[...] = isp
            inv_lp_s[...] = ilp
            off_s[...] = -(spmin * isp + lpmin * ilp)

        @pl.when(p == 1)
        def _accum():
            # w_sp * w_lp = exp(y_sp*inv_sp + y_lp*inv_lp + off)  -- single EUP pass.
            # TODO(synk): a bf16 exp roughly doubles EUP throughput on v6e/v7x; kept
            #             f32 so the same kernel stays accurate on v5e (no bf16 EUP).
            expo = y_sp * inv_sp_s[...] + y_lp * inv_lp_s[...] + off_s[...]
            contrib = jnp.exp(expo) * jnp.abs(gt_f - pred_ref[...].astype(jnp.float32))
            acc[...] = acc[...] + _fold_rows(contrib, jnp.add)

        @pl.when((p == 1) & (t == pl.num_programs(1) - 1))
        def _final():
            out_ref[...] = _collapse(acc[...], jnp.sum) * inv_total

    in_specs = [
        pl.BlockSpec((tr, hw), lambda p, t: (t, 0)),        # gt: streamed both passes
        pl.BlockSpec((tr, hw), lambda p, t: (t * p, 0)),    # pred: only moves in pass 1
    ]
    # TODO(synk): the resident operator blocks could be single-buffered
    #             (pipeline_mode=pl.Buffered(1)) to save VMEM on v7x.
    if use_lowrank:
        kp = ops_bf[0].shape[1]
        in_specs += [pl.BlockSpec((hw, kp), lambda p, t: (0, 0)),
                     pl.BlockSpec((kp, hw), lambda p, t: (0, 0))]
    else:
        in_specs += [pl.BlockSpec((hw, hw), lambda p, t: (0, 0))]

    op_bytes = sum(int(np.prod(o.shape)) * 2 for o in ops_bf)
    est = (2 * 2 * tr * hw * 2      # gt + pred tiles, double-buffered, bf16
           + 2 * op_bytes           # resident operator blocks (2 buffers each)
           + 5 * 8 * hw * 4         # lane-wide stat / sum accumulators
           + 8 * tr * hw * 4        # live f32 intermediates in pass 1
           + (2 << 20))             # headroom
    vmem = min(max(est, _VMEM_FLOOR), _VMEM_CAP)

    out = pl.pallas_call(
        kernel,
        out_shape=jax.ShapeDtypeStruct((1, 1), jnp.float32),
        grid=(2, n_tiles),
        in_specs=in_specs,
        out_specs=pl.BlockSpec((1, 1), lambda p, t: (0, 0)),
        scratch_shapes=[
            pltpu.VMEM((8, hw), jnp.float32),   # sp_min
            pltpu.VMEM((8, hw), jnp.float32),   # sp_max
            pltpu.VMEM((8, hw), jnp.float32),   # lp_min
            pltpu.VMEM((8, hw), jnp.float32),   # lp_max
            pltpu.VMEM((8, hw), jnp.float32),   # weighted-L1 partial sums
            pltpu.VMEM((1, 1), jnp.float32),    # inv_sp (hoisted scale)
            pltpu.VMEM((1, 1), jnp.float32),    # inv_lp
            pltpu.VMEM((1, 1), jnp.float32),    # offset
        ],
        # both axes touch shared scratch -> "arbitrary".
        # TODO(synk): on v7x, splitting into a stats call + a sum call with the row-tile
        #             axis "parallel" would use both TensorCores.
        compiler_params=pltpu.CompilerParams(
            dimension_semantics=("arbitrary", "arbitrary"),
            vmem_limit_bytes=vmem,
        ),
    )(gt_bf, pred_bf, *ops_bf)
    return out[0, 0]


# ----------------------------- dispatcher -----------------------------

def _pick_row_tile(rows, max_tr=256):
    """Largest divisor of rows that is a multiple of 16 (bf16 sublane packing) and
    <= max_tr (fills the MXU: 128 rows on v5e, 256 on v6e/v7x)."""
    best = None
    for cand in range(16, min(rows, max_tr) + 1, 16):
        if rows % cand == 0:
            best = cand
    return best


def fal_loss(pred, gt, ops, *, force_tiled=False):
    """pred, gt: (B, C, H, W) float32.  ops: output of build_lowpass_operator(H, W)."""
    B, C, H, W = gt.shape
    rows, hw = B * C, H * W
    use_lowrank = len(ops) == 2
    if use_lowrank:
        assert ops[0].shape[0] == hw and ops[1].shape[1] == hw, \
            "low-pass factors were built for a different (H, W)"
        assert ops[0].shape[1] == ops[1].shape[0]
    else:
        assert ops[0].shape == (hw, hw), \
            "low-pass operator was built for a different (H, W)"

    gt_flat = gt.reshape(rows, hw).astype(jnp.float32)
    pred_flat = pred.reshape(rows, hw).astype(jnp.float32)
    inv_total = 1.0 / float(rows * hw)

    op_bytes = sum(int(np.prod(o.shape)) * 4 for o in ops)
    resident_working = 8 * rows * hw * 4 + 2 * op_bytes
    if not force_tiled and resident_working <= _RESIDENT_BUDGET:
        return _fal_loss_resident(gt_flat, pred_flat, ops, use_lowrank, inv_total)

    tr = _pick_row_tile(rows)
    if tr is None:
        # TODO(synk): pad + mask row counts that are not a multiple of 16 instead of
        #             falling back to the fully-resident path.
        return _fal_loss_resident(gt_flat, pred_flat, ops, use_lowrank, inv_total)
    return _fal_loss_tiled(gt_flat, pred_flat, ops, use_lowrank, inv_total, tr)


# ----------------------------- float64 numpy reference -----------------------------

def fal_loss_ref(pred, gt):
    gt = np.asarray(gt, np.float64)
    pred = np.asarray(pred, np.float64)
    H, W = gt.shape[2], gt.shape[3]
    mask = circle_filter(H, W, 2, 1.0).astype(np.float64)
    freq = np.fft.fftshift(np.fft.fft2(gt, axes=(2, 3), norm="ortho"), axes=(2, 3))
    low = np.fft.ifft2(np.fft.ifftshift(freq * mask, axes=(2, 3)),
                       axes=(2, 3), norm="ortho").real
    y_sp = np.abs(gt - low)
    y_lp = np.abs(low)
    w_sp = np.exp((y_sp - y_sp.min()) / (y_sp.max() - y_sp.min()) * OMEGA_SP)
    w_lp = np.exp((y_lp - y_lp.min()) / (y_lp.max() - y_lp.min()) * OMEGA_LP)
    return float(np.mean(w_sp * w_lp * np.abs(gt - pred)))


# ----------------------------- main -----------------------------

if __name__ == "__main__":
    key = jax.random.PRNGKey(0)
    k1, k2, k3, k4 = jax.random.split(key, 4)

    # Shipped shape: resident single-pass fast path, dense f32 operator.
    B, C, H, W = 2, 4, 16, 16
    gt = jax.random.normal(k1, (B, C, H, W), dtype=jnp.float32)
    pred = jax.random.normal(k2, (B, C, H, W), dtype=jnp.float32)
    ops = build_lowpass_operator(H, W)
    loss = jax.block_until_ready(fal_loss(pred, gt, ops))
    np.testing.assert_allclose(float(loss), fal_loss_ref(pred, gt), rtol=1e-2, atol=1e-2)

    # Larger check: tiled two-pass streaming path (bf16 streaming, low-rank MXU factors).
    B2, C2, H2, W2 = 16, 32, 32, 32
    gt2 = jax.random.normal(k3, (B2, C2, H2, W2), dtype=jnp.float32)
    pred2 = jax.random.normal(k4, (B2, C2, H2, W2), dtype=jnp.float32)
    ops2 = build_lowpass_operator(H2, W2)
    loss2 = jax.block_until_ready(fal_loss(pred2, gt2, ops2, force_tiled=True))
    np.testing.assert_allclose(float(loss2), fal_loss_ref(pred2, gt2), rtol=5e-2, atol=5e-2)

    print("KERNEL_OK")
</pallas_src>

<mosaic_0001>
module attributes {stable_mosaic.version = 11 : i64} {
  func.func @kernel(%arg0: memref<8x256xf32, #tpu.memory_space<vmem>>, %arg1: memref<8x256xf32, #tpu.memory_space<vmem>>, %arg2: memref<256x256xf32, #tpu.memory_space<vmem>>, %arg3: memref<1x1xf32, #tpu.memory_space<vmem>>) attributes {dimension_semantics = [], scalar_prefetch = 0 : i64, scratch_operands = 0 : i64, tpu.core_type = #tpu.core_type<tc>} {
    %c0 = arith.constant 0 : index
    %c0_0 = arith.constant 0 : index
    %0 = vector.load %arg0[%c0, %c0_0] : memref<8x256xf32, #tpu.memory_space<vmem>>, vector<8x256xf32>
    %c0_1 = arith.constant 0 : index
    %c0_2 = arith.constant 0 : index
    %1 = vector.load %arg2[%c0_1, %c0_2] : memref<256x256xf32, #tpu.memory_space<vmem>>, vector<256x256xf32>
    %cst = arith.constant dense<0.000000e+00> : vector<8x256xf32>
    %2 = tpu.matmul %0, %1, %cst {dimension_numbers = #tpu.dot_dimension_numbers<[1], [0], [0], [1], [0, 0, 1, 1], [], []>} : vector<8x256xf32>, vector<256x256xf32>, vector<8x256xf32> -> vector<8x256xf32>
    %3 = arith.subf %0, %2 : vector<8x256xf32>
    %4 = math.absf %3 : vector<8x256xf32>
    %5 = math.absf %2 : vector<8x256xf32>
    %cst_3 = arith.constant dense<0x7F800000> : vector<8xf32>
    %6 = vector.multi_reduction <minimumf>, %4, %cst_3 [1] : vector<8x256xf32> to vector<8xf32>
    %7 = vector.shape_cast %6 : vector<8xf32> to vector<8x1xf32>
    %cst_4 = arith.constant dense<0x7F800000> : vector<1xf32>
    %8 = vector.multi_reduction <minimumf>, %7, %cst_4 [0] : vector<8x1xf32> to vector<1xf32>
    %9 = vector.shape_cast %8 : vector<1xf32> to vector<1x1xf32>
    %cst_5 = arith.constant dense<0xFF800000> : vector<8xf32>
    %10 = vector.multi_reduction <maximumf>, %4, %cst_5 [1] : vector<8x256xf32> to vector<8xf32>
    %11 = vector.shape_cast %10 : vector<8xf32> to vector<8x1xf32>
    %cst_6 = arith.constant dense<0xFF800000> : vector<1xf32>
    %12 = vector.multi_reduction <maximumf>, %11, %cst_6 [0] : vector<8x1xf32> to vector<1xf32>
    %13 = vector.shape_cast %12 : vector<1xf32> to vector<1x1xf32>
    %cst_7 = arith.constant dense<0x7F800000> : vector<8xf32>
    %14 = vector.multi_reduction <minimumf>, %5, %cst_7 [1] : vector<8x256xf32> to vector<8xf32>
    %15 = vector.shape_cast %14 : vector<8xf32> to vector<8x1xf32>
    %cst_8 = arith.constant dense<0x7F800000> : vector<1xf32>
    %16 = vector.multi_reduction <minimumf>, %15, %cst_8 [0] : vector<8x1xf32> to vector<1xf32>
    %17 = vector.shape_cast %16 : vector<1xf32> to vector<1x1xf32>
    %cst_9 = arith.constant dense<0xFF800000> : vector<8xf32>
    %18 = vector.multi_reduction <maximumf>, %5, %cst_9 [1] : vector<8x256xf32> to vector<8xf32>
    %19 = vector.shape_cast %18 : vector<8xf32> to vector<8x1xf32>
    %cst_10 = arith.constant dense<0xFF800000> : vector<1xf32>
    %20 = vector.multi_reduction <maximumf>, %19, %cst_10 [0] : vector<8x1xf32> to vector<1xf32>
    %21 = vector.shape_cast %20 : vector<1xf32> to vector<1x1xf32>
    %22 = arith.subf %13, %9 : vector<1x1xf32>
    %cst_11 = arith.constant 1.000000e+00 : f32
    %23 = vector.broadcast %cst_11 : f32 to vector<1x1xf32>
    %24 = arith.divf %23, %22 : vector<1x1xf32>
    %25 = arith.subf %21, %17 : vector<1x1xf32>
    %cst_12 = arith.constant 5.000000e-01 : f32
    %26 = vector.broadcast %cst_12 : f32 to vector<1x1xf32>
    %27 = arith.divf %26, %25 : vector<1x1xf32>
    %28 = vector.broadcast %9 : vector<1x1xf32> to vector<8x256xf32>
    %29 = arith.subf %4, %28 : vector<8x256xf32>
    %30 = vector.broadcast %24 : vector<1x1xf32> to vector<8x256xf32>
    %31 = arith.mulf %29, %30 : vector<8x256xf32>
    %32 = vector.broadcast %17 : vector<1x1xf32> to vector<8x256xf32>
    %33 = arith.subf %5, %32 : vector<8x256xf32>
    %34 = vector.broadcast %27 : vector<1x1xf32> to vector<8x256xf32>
    %35 = arith.mulf %33, %34 : vector<8x256xf32>
    %36 = arith.addf %31, %35 : vector<8x256xf32>
    %37 = math.exp %36 : vector<8x256xf32>
    %c0_13 = arith.constant 0 : index
    %c0_14 = arith.constant 0 : index
    %38 = vector.load %arg1[%c0_13, %c0_14] : memref<8x256xf32, #tpu.memory_space<vmem>>, vector<8x256xf32>
    %39 = arith.subf %0, %38 : vector<8x256xf32>
    %40 = math.absf %39 : vector<8x256xf32>
    %41 = arith.mulf %37, %40 : vector<8x256xf32>
    %cst_15 = arith.constant dense<0.000000e+00> : vector<8xf32>
    %42 = vector.multi_reduction <add>, %41, %cst_15 [1] : vector<8x256xf32> to vector<8xf32>
    %43 = vector.shape_cast %42 : vector<8xf32> to vector<8x1xf32>
    %cst_16 = arith.constant dense<0.000000e+00> : vector<1xf32>
    %44 = vector.multi_reduction <add>, %43, %cst_16 [0] : vector<8x1xf32> to vector<1xf32>
    %45 = vector.shape_cast %44 : vector<1xf32> to vector<1x1xf32>
    %cst_17 = arith.constant 4.8828125E-4 : f32
    %46 = vector.broadcast %cst_17 : f32 to vector<1x1xf32>
    %47 = arith.mulf %45, %46 : vector<1x1xf32>
    %c0_18 = arith.constant 0 : index
    %c0_19 = arith.constant 0 : index
    %48 = vector.load %arg3[%c0_18, %c0_19] : memref<1x1xf32, #tpu.memory_space<vmem>>, vector<1x1xf32>
    tpu.vector_store %arg3[%c0_18, %c0_19], %47 {strides = array<i32>} : memref<1x1xf32, #tpu.memory_space<vmem>>, vector<1x1xf32>,
    return
  }
}

</mosaic_0001>

<llo_original>
// kernel: tpu_custom_call.1
$region0: #{tpu_custom_call.1}
  #allocation0 [shape = 'u32[]', space=smem, size = 0x4, offset = 0x4, fixed_abs, tag = 'smem constant byte address 0x4 - core index']
  #allocation1 [shape = 'u32[72,128]{1,0:T(1,128)}', space=vmem, size = 0x9000, scoped, tag = 'internal scratch']
  %s0 = inlined_call_operand.hbm [shape: f32[8,256], index: 0, kind: input, shape index: {}]
  %s1 = inlined_call_operand.hbm [shape: f32[8,256], index: 1, kind: input, shape index: {}]
  %s2 = inlined_call_operand.hbm [shape: f32[256,256], index: 2, kind: input, shape index: {}]
  %s3 = inlined_call_operand.hbm [shape: f32[1,1], index: 3, kind: output, shape index: {}]
  %s4 = sld [smem:[#allocation0]]
  $region34: #{tpu_custom_call.1} parent=0
    _
  %s6 = ssub.s32 1, %s4
  %s7 = scalar_select 0, %s6, %s4
  $region1: #{tpu_custom_call.1} parent=0
    #allocation2 [shape = 'u8[8192]{0}', space=vmem, size = 0x2000, scoped, tag = 'input window, operand 0, single buffered']
    #allocation3 [shape = 's32[1]{0}', space=sflag, size = 0x4, scoped, tag = 'scoped memory for tpu_custom_call.1']
    #allocation4 [shape = 's32[1]{0}', space=sflag, size = 0x4, scoped, tag = 'scoped memory for tpu_custom_call.1']
    #allocation5 [shape = 'u8[8192]{0}', space=vmem, size = 0x2000, scoped, tag = 'input window, operand 1, single buffered']
    #allocation6 [shape = 's32[1]{0}', space=sflag, size = 0x4, scoped, tag = 'scoped memory for tpu_custom_call.1']
    #allocation7 [shape = 'u8[262144]{0}', space=vmem, size = 0x40000, scoped, tag = 'input window, operand 2, single buffered']
    #allocation8 [shape = 'u8[512]{0}', space=vmem, size = 0x400, scoped, tag = 'output window, operand 0, single buffered']
    %8 = vsyncpa [#allocation3], 0
    %9 = vsyncpa [#allocation6], 0
    %10 = vsyncpa [#allocation4], 0
    // Predicated region
    $region2: #{tpu_custom_call.1} parent=1 // pred_check
      _
    $region3: #{tpu_custom_call.1} parent=1 // pred_check_branch
      %12 = sbr.rel (0) target = $region5
    $region4: #{tpu_custom_call.1} parent=1 // pred_region
      %14 = vsyncadd [#allocation3], 0
      %s16 = sshll.u32 %s0, 4
      %s17 = int_to_ptr.hbm [resolvable:$true] %s16
      %s18 = sshll.u32 [#allocation2], 4
      %s19 = int_to_ptr.vmem [resolvable:$true] %s18
      %21 = dma.hbm_to_vmem [thread:$0]  %s17, 256, %s19, [#allocation3]
    $region5: #{tpu_custom_call.1} parent=1 // pred_fallthru
      _
    // Predicated region
    $region6: #{tpu_custom_call.1} parent=1 // pred_check
      _
    $region7: #{tpu_custom_call.1} parent=1 // pred_check_branch
      %23 = sbr.rel (0) target = $region9
    $region8: #{tpu_custom_call.1} parent=1 // pred_region
      %25 = vsyncadd [#allocation6], 0
      %s27 = sshll.u32 %s1, 4
      %s28 = int_to_ptr.hbm [resolvable:$true] %s27
      %s29 = sshll.u32 [#allocation5], 4
      %s30 = int_to_ptr.vmem [resolvable:$true] %s29
      %32 = dma.hbm_to_vmem [thread:$0]  %s28, 256, %s30, [#allocation6]
    $region9: #{tpu_custom_call.1} parent=1 // pred_fallthru
      _
    // Predicated region
    $region10: #{tpu_custom_call.1} parent=1 // pred_check
      _
    $region11: #{tpu_custom_call.1} parent=1 // pred_check_branch
      %34 = sbr.rel (0) target = $region13
    $region12: #{tpu_custom_call.1} parent=1 // pred_region
      %36 = vsyncadd [#allocation6], 0
      %s37 = sshll.u32 %s2, 4
      %s38 = int_to_ptr.hbm [resolvable:$true] %s37
      %s39 = sshll.u32 [#allocation7], 4
      %s40 = int_to_ptr.vmem [resolvable:$true] %s39
      %45 = dma.hbm_to_vmem [thread:$0]  %s38, 8192, %s40, [#allocation6], 256, 256, 16
    $region13: #{tpu_custom_call.1} parent=1 // pred_fallthru
      _
    // Predicated region
    $region14: #{tpu_custom_call.1} parent=1 // pred_check
      _
    $region15: #{tpu_custom_call.1} parent=1 // pred_check_branch
      %47 = sbr.rel (0) target = $region17
    $region16: #{tpu_custom_call.1} parent=1 // pred_region
      %49 = dma.done [#allocation3], 256
    $region17: #{tpu_custom_call.1} parent=1 // pred_fallthru
      _
    // Predicated region
    $region18: #{tpu_custom_call.1} parent=1 // pred_check
      _
    $region19: #{tpu_custom_call.1} parent=1 // pred_check_branch
      %51 = sbr.rel (0) target = $region21
    $region20: #{tpu_custom_call.1} parent=1 // pred_region
      %53 = dma.done [#allocation6], 256
    $region21: #{tpu_custom_call.1} parent=1 // pred_fallthru
      _
    // Predicated region
    $region22: #{tpu_custom_call.1} parent=1 // pred_check
      _
    $region23: #{tpu_custom_call.1} parent=1 // pred_check_branch
      %55 = sbr.rel (0) target = $region25
    $region24: #{tpu_custom_call.1} parent=1 // pred_region
      %57 = dma.done [#allocation6], 8192
    $region25: #{tpu_custom_call.1} parent=1 // pred_fallthru
      _
    %v58 = vld [vmem:[#allocation2] sm:$0xff]
    %v59 = vld [vmem:[#allocation2 + $0x8] sm:$0xff]
    %v60 = vld [vmem:[#allocation7] sm:$0xff]
    %v61 = vld [vmem:[#allocation7 + $0x8] sm:$0xff]
    %v62 = vld [vmem:[#allocation7 + $0x10] sm:$0xff]
    %v63 = vld [vmem:[#allocation7 + $0x18] sm:$0xff]
    %v64 = vld [vmem:[#allocation7 + $0x20] sm:$0xff]
    %v65 = vld [vmem:[#allocation7 + $0x28] sm:$0xff]
    %v66 = vld [vmem:[#allocation7 + $0x30] sm:$0xff]
    %v67 = vld [vmem:[#allocation7 + $0x38] sm:$0xff]
    %v68 = vld [vmem:[#allocation7 + $0x40] sm:$0xff]
    %v69 = vld [vmem:[#allocation7 + $0x48] sm:$0xff]
    %v70 = vld [vmem:[#allocation7 + $0x50] sm:$0xff]
    %v71 = vld [vmem:[#allocation7 + $0x58] sm:$0xff]
    %v72 = vld [vmem:[#allocation7 + $0x60] sm:$0xff]
    %v73 = vld [vmem:[#allocation7 + $0x68] sm:$0xff]
    %v74 = vld [vmem:[#allocation7 + $0x70] sm:$0xff]
    %v75 = vld [vmem:[#allocation7 + $0x78] sm:$0xff]
    %v76 = vld [vmem:[#allocation7 + $0x80] sm:$0xff]
    %v77 = vld [vmem:[#allocation7 + $0x88] sm:$0xff]
    %v78 = vld [vmem:[#allocation7 + $0x90] sm:$0xff]
    %v79 = vld [vmem:[#allocation7 + $0x98] sm:$0xff]
    %v80 = vld [vmem:[#allocation7 + $0xa0] sm:$0xff]
    %v81 = vld [vmem:[#allocation7 + $0xa8] sm:$0xff]
    %v82 = vld [vmem:[#allocation7 + $0xb0] sm:$0xff]
    %v83 = vld [vmem:[#allocation7 + $0xb8] sm:$0xff]
    %v84 = vld [vmem:[#allocation7 + $0xc0] sm:$0xff]
    %v85 = vld [vmem:[#allocation7 + $0xc8] sm:$0xff]
    %v86 = vld [vmem:[#allocation7 + $0xd0] sm:$0xff]
    %v87 = vld [vmem:[#allocation7 + $0xd8] sm:$0xff]
    %v88 = vld [vmem:[#allocation7 + $0xe0] sm:$0xff]
    %v89 = vld [vmem:[#allocation7 + $0xe8] sm:$0xff]
    %v90 = vld [vmem:[#allocation7 + $0xf0] sm:$0xff]
    %v91 = vld [vmem:[#allocation7 + $0xf8] sm:$0xff]
    %v92 = vld [vmem:[#allocation7 + $0x100] sm:$0xff]
    %v93 = vld [vmem:[#allocation7 + $0x108] sm:$0xff]
    %v94 = vld [vmem:[#allocation7 + $0x110] sm:$0xff]
    %v95 = vld [vmem:[#allocation7 + $0x118] sm:$0xff]
    %v96 = vld [vmem:[#allocation7 + $0x120] sm:$0xff]
    %v97 = vld [vmem:[#allocation7 + $0x128] sm:$0xff]
    %v98 = vld [vmem:[#allocation7 + $0x130] sm:$0xff]
    %v99 = vld [vmem:[#allocation7 + $0x138] sm:$0xff]
    %v100 = vld [vmem:[#allocation7 + $0x140] sm:$0xff]
    %v101 = vld [vmem:[#allocation7 + $0x148] sm:$0xff]
    %v102 = vld [vmem:[#allocation7 + $0x150] sm:$0xff]
    %v103 = vld [vmem:[#allocation7 + $0x158] sm:$0xff]
    %v104 = vld [vmem:[#allocation7 + $0x160] sm:$0xff]
    %v105 = vld [vmem:[#allocation7 + $0x168] sm:$0xff]
    %v106 = vld [vmem:[#allocation7 + $0x170] sm:$0xff]
    %v107 = vld [vmem:[#allocation7 + $0x178] sm:$0xff]
    %v108 = vld [vmem:[#allocation7 + $0x180] sm:$0xff]
    %v109 = vld [vmem:[#allocation7 + $0x188] sm:$0xff]
    %v110 = vld [vmem:[#allocation7 + $0x190] sm:$0xff]
    %v111 = vld [vmem:[#allocation7 + $0x198] sm:$0xff]
    %v112 = vld [vmem:[#allocation7 + $0x1a0] sm:$0xff]
    %v113 = vld [vmem:[#allocation7 + $0x1a8] sm:$0xff]
    %v114 = vld [vmem:[#allocation7 + $0x1b0] sm:$0xff]
    %v115 = vld [vmem:[#allocation7 + $0x1b8] sm:$0xff]
    %v116 = vld [vmem:[#allocation7 + $0x1c0] sm:$0xff]
    %v117 = vld [vmem:[#allocation7 + $0x1c8] sm:$0xff]
    %v118 = vld [vmem:[#allocation7 + $0x1d0] sm:$0xff]
    %v119 = vld [vmem:[#allocation7 + $0x1d8] sm:$0xff]
    %v120 = vld [vmem:[#allocation7 + $0x1e0] sm:$0xff]
    %v121 = vld [vmem:[#allocation7 + $0x1e8] sm:$0xff]
    %v122 = vld [vmem:[#allocation7 + $0x1f0] sm:$0xff]
    %v123 = vld [vmem:[#allocation7 + $0x1f8] sm:$0xff]
    %124 = vmatpush.msra.mxu0 %v90
    %125 = vmatpush.msra.mxu0 %v88
    %126 = vmatpush.msra.mxu0 %v86
    %127 = vmatpush.msra.mxu0 %v84
    %128 = vmatpush.msra.mxu0 %v82
    %129 = vmatpush.msra.mxu0 %v80
    %130 = vmatpush.msra.mxu0 %v78
    %131 = vmatpush.msra.mxu0 %v76
    %132 = vmatpush.msra.mxu0 %v74
    %133 = vmatpush.msra.mxu0 %v72
    %134 = vmatpush.msra.mxu0 %v70
    %135 = vmatpush.msra.mxu0 %v68
    %136 = vmatpush.msra.mxu0 %v66
    %137 = vmatpush.msra.mxu0 %v64
    %138 = vmatpush.msra.mxu0 %v62
    %139 = vmatpush.msra.mxu0 %v60
    %140 = vmatmul.f32.gmra.mxu0 %v58
    %v141 = vpop.f32.mrf.mxu0
    %v142 = vadd.f32 0.0, %v141
    %143 = vdwg.mxu0
    %144 = vmatpush.msra.mxu0 %v122
    %145 = vmatpush.msra.mxu0 %v120
    %146 = vmatpush.msra.mxu0 %v118
    %147 = vmatpush.msra.mxu0 %v116
    %148 = vmatpush.msra.mxu0 %v114
    %149 = vmatpush.msra.mxu0 %v112
    %150 = vmatpush.msra.mxu0 %v110
    %151 = vmatpush.msra.mxu0 %v108
    %152 = vmatpush.msra.mxu0 %v106
    %153 = vmatpush.msra.mxu0 %v104
    %154 = vmatpush.msra.mxu0 %v102
    %155 = vmatpush.msra.mxu0 %v100
    %156 = vmatpush.msra.mxu0 %v98
    %157 = vmatpush.msra.mxu0 %v96
    %158 = vmatpush.msra.mxu0 %v94
    %159 = vmatpush.msra.mxu0 %v92
    %160 = vmatmul.f32.gmra.mxu0 %v59
    %v161 = vpop.f32.mrf.mxu0
    %v162 = vadd.f32 %v142, %v161
    %163 = vdwg.mxu0
    %164 = vmatpush.msra.mxu0 %v91
    %165 = vmatpush.msra.mxu0 %v89
    %166 = vmatpush.msra.mxu0 %v87
    %167 = vmatpush.msra.mxu0 %v85
    %168 = vmatpush.msra.mxu0 %v83
    %169 = vmatpush.msra.mxu0 %v81
    %170 = vmatpush.msra.mxu0 %v79
    %171 = vmatpush.msra.mxu0 %v77
    %172 = vmatpush.msra.mxu0 %v75
    %173 = vmatpush.msra.mxu0 %v73
    %174 = vmatpush.msra.mxu0 %v71
    %175 = vmatpush.msra.mxu0 %v69
    %176 = vmatpush.msra.mxu0 %v67
    %177 = vmatpush.msra.mxu0 %v65
    %178 = vmatpush.msra.mxu0 %v63
    %179 = vmatpush.msra.mxu0 %v61
    %180 = vmatmul.f32.gmra.mxu0 %v58
    %v181 = vpop.f32.mrf.mxu0
    %v182 = vadd.f32 0.0, %v181
    %183 = vdwg.mxu0
    %184 = vmatpush.msra.mxu0 %v123
    %185 = vmatpush.msra.mxu0 %v121
    %186 = vmatpush.msra.mxu0 %v119
    %187 = vmatpush.msra.mxu0 %v117
    %188 = vmatpush.msra.mxu0 %v115
    %189 = vmatpush.msra.mxu0 %v113
    %190 = vmatpush.msra.mxu0 %v111
    %191 = vmatpush.msra.mxu0 %v109
    %192 = vmatpush.msra.mxu0 %v107
    %193 = vmatpush.msra.mxu0 %v105
    %194 = vmatpush.msra.mxu0 %v103
    %195 = vmatpush.msra.mxu0 %v101
    %196 = vmatpush.msra.mxu0 %v99
    %197 = vmatpush.msra.mxu0 %v97
    %198 = vmatpush.msra.mxu0 %v95
    %199 = vmatpush.msra.mxu0 %v93
    %200 = vmatmul.f32.gmra.mxu0 %v59
    %v201 = vpop.f32.mrf.mxu0
    %v202 = vadd.f32 %v182, %v201
    %203 = vdwg.mxu0
    %v204 = vsub.f32 %v58, %v162
    %v205 = vsub.f32 %v59, %v202
    %v206 = vand.u32 2147483647, %v204
    %v207 = vand.u32 2147483647, %v205
    %v208 = vand.u32 2147483647, %v162
    %v209 = vand.u32 2147483647, %v202
    %v210 = vmin.f32 %v206, %v207
    %211 = vmin.xlane.f32.xlu0 %v210
    %v212 = vpop.xlane.xlu0 %211
    %v213 = vrot.slane %v212, 4
    %v214 = vmin.f32 %v212, %v213
    %v215 = vrot.slane %v214, 2
    %v216 = vmin.f32 %v214, %v215
    %v217 = vrot.slane %v216, 1
    %v218 = vmin.f32 %v216, %v217
    %v219 = vmax.f32 %v206, %v207
    %220 = vmax.xlane.f32.xlu0 %v219
    %v221 = vpop.xlane.xlu0 %220
    %v222 = vrot.slane %v221, 4
    %v223 = vmax.f32 %v221, %v222
    %v224 = vrot.slane %v223, 2
    %v225 = vmax.f32 %v223, %v224
    %v226 = vrot.slane %v225, 1
    %v227 = vmax.f32 %v225, %v226
    %v228 = vmin.f32 %v208, %v209
    %229 = vmin.xlane.f32.xlu0 %v228
    %v230 = vpop.xlane.xlu0 %229
    %v231 = vrot.slane %v230, 4
    %v232 = vmin.f32 %v230, %v231
    %v233 = vrot.slane %v232, 2
    %v234 = vmin.f32 %v232, %v233
    %v235 = vrot.slane %v234, 1
    %v236 = vmin.f32 %v234, %v235
    %v237 = vmax.f32 %v208, %v209
    %238 = vmax.xlane.f32.xlu0 %v237
    %v239 = vpop.xlane.xlu0 %238
    %v240 = vrot.slane %v239, 4
    %v241 = vmax.f32 %v239, %v240
    %v242 = vrot.slane %v241, 2
    %v243 = vmax.f32 %v241, %v242
    %v244 = vrot.slane %v243, 1
    %v245 = vmax.f32 %v243, %v244
    %v246 = vsub.f32 %v227, %v218
    %v247 = vrcp.pop %v246
    %v248 = vmul.f32 %v246, %v247
    %v249 = vsub.f32 1.0, %v248
    %v250 = vmul.f32 %v247, %v249
    %v251 = vadd.f32 %v247, %v250
    %vm252 = vweird.f32 %v246
    %vm253 = vweird.f32 %v247
    %vm254 = vmor %vm252, %vm253
    %v255 = vsel %vm254, %v247, %v251
    %v256 = vand.u32 2147483647, %v246
    %vm257 = vcmp.eq.f32.partialorder %v256, 8.507059e+37
    %v258 = vand.u32 %v246, 2147483648
    %v259 = vor.u32 1.1754944e-38, %v258
    %v260 = vsel %vm257, %v259, %v255
    %v261 = vmul.f32 1.0, %v260
    %v262 = vsub.f32 %v245, %v236
    %v263 = vrcp.pop %v262
    %v264 = vmul.f32 %v262, %v263
    %v265 = vsub.f32 1.0, %v264
    %v266 = vmul.f32 %v263, %v265
    %v267 = vadd.f32 %v263, %v266
    %vm268 = vweird.f32 %v262
    %vm269 = vweird.f32 %v263
    %vm270 = vmor %vm268, %vm269
    %v271 = vsel %vm270, %v263, %v267
    %v272 = vand.u32 2147483647, %v262
    %vm273 = vcmp.eq.f32.partialorder %v272, 8.507059e+37
    %v274 = vand.u32 %v262, 2147483648
    %v275 = vor.u32 1.1754944e-38, %v274
    %v276 = vsel %vm273, %v275, %v271
    %v277 = vmul.f32 0.5, %v276
    %v278 = vsub.f32 %v206, %v218
    %v279 = vsub.f32 %v207, %v218
    %v280 = vmul.f32 %v278, %v261
    %v281 = vmul.f32 %v279, %v261
    %v282 = vsub.f32 %v208, %v236
    %v283 = vsub.f32 %v209, %v236
    %v284 = vmul.f32 %v282, %v277
    %v285 = vmul.f32 %v283, %v277
    %v286 = vadd.f32 %v280, %v284
    %v287 = vadd.f32 %v281, %v285
    %v288 = vmul.f32 %v286, 1.442695
    %v289 = vpow.pop %v288
    %v290 = vmul.f32 %v287, 1.442695
    %v291 = vpow.pop %v290
    %v292 = vld [vmem:[#allocation5] sm:$0xff]
    %v293 = vld [vmem:[#allocation5 + $0x8] sm:$0xff]
    %v294 = vsub.f32 %v58, %v292
    %v295 = vsub.f32 %v59, %v293
    %v296 = vand.u32 2147483647, %v294
    %v297 = vand.u32 2147483647, %v295
    %v298 = vmul.f32 %v289, %v296
    %v299 = vmul.f32 %v291, %v297
    %v300 = vadd.f32 %v298, %v299
    %301 = vadd.xlane.f32.xlu0 %v300
    %v302 = vpop.xlane.xlu0 %301
    %v303 = vrot.slane %v302, 4
    %v304 = vadd.f32 %v302, %v303
    %v305 = vrot.slane %v304, 2
    %v306 = vadd.f32 %v304, %v305
    %v307 = vrot.slane %v306, 1
    %v308 = vadd.f32 %v306, %v307
    %v309 = vmul.f32 %v308, 0.00048828125
    %vm310 = vcmask 0
    %311 = vst.msk [vmem:[#allocation8] sm:$0x1] %vm310, %v309
    // Predicated region
    $region26: #{tpu_custom_call.1} parent=1 // pred_check
      _
    $region27: #{tpu_custom_call.1} parent=1 // pred_check_branch
      %313 = sbr.rel (0) target = $region29
    $region28: #{tpu_custom_call.1} parent=1 // pred_region
      %315 = vsyncadd [#allocation4], 0
      %s317 = sshll.u32 [#allocation8], 4
      %s318 = int_to_ptr.vmem [resolvable:$true] %s317
      %s319 = sshll.u32 %s3, 4
      %s320 = int_to_ptr.hbm [resolvable:$true] %s319
      %322 = dma.vmem_to_hbm [thread:$0]  %s318, 16, %s320, [#allocation4]
    $region29: #{tpu_custom_call.1} parent=1 // pred_fallthru
      _
    // Predicated region
    $region30: #{tpu_custom_call.1} parent=1 // pred_check
      _
    $region31: #{tpu_custom_call.1} parent=1 // pred_check_branch
      %324 = sbr.rel (0) target = $region33
    $region32: #{tpu_custom_call.1} parent=1 // pred_region
      %326 = dma.done [#allocation4], 16
    $region33: #{tpu_custom_call.1} parent=1 // pred_fallthru
      _
    %327 = vsyncpa [#allocation3], 1
    %328 = vsyncpa [#allocation6], 1
    %329 = vsyncpa [#allocation4], 1

</llo_original>
